<compile_context>
chip_gen: v5e
topology: v5e:2x2
jax: 0.10.0
libtpu: 0.0.40
codegen_flags: <defaults>
</compile_context>

<pallas_src>
import jax
import jax.numpy as jnp
from jax.experimental import pallas as pl
from jax.experimental.pallas import tpu as pltpu


def _context_concat_kernel(start_ref, goal_ref, env_ref, out_ref):
    ds = start_ref.shape[-1]
    dg = goal_ref.shape[-1]
    de = env_ref.shape[-1]
    dt = out_ref.dtype
    # Big environment block first: lane offset 0 is 128-aligned -> dense,
    # unmasked vector stores for the dominant part of the output tile.
    out_ref[:, pl.ds(0, de)] = env_ref[...].astype(dt)
    # Tiny start/goal vectors at the tail (masked stores on a few lanes only).
    out_ref[:, pl.ds(de, ds)] = start_ref[...].astype(dt)
    out_ref[:, pl.ds(de + ds, dg)] = goal_ref[...].astype(dt)


def _pick_batch_tile(B, row_bytes, vmem_budget_bytes=16 * 1024 * 1024):
    """Largest batch tile (multiple of 8) whose double-buffered in+out
    footprint fits a conservative VMEM budget (safe on v5e/v6e/v7x)."""
    if B < 8:
        return B  # block dim equals the full array dim -> allowed
    tb = max(8, min(B, vmem_budget_bytes // (2 * row_bytes)))
    return (tb // 8) * 8


def base_context_net_forward(start, goal, environment, *, batch_tile=None):
    """start: (B, Ds), goal: (B, Dg), environment: (B, C, H, W) NCHW.

    Returns the fused context (B, C*H*W + Ds + Dg) with the flattened
    environment first (lane-aligned), then start, then goal.
    """
    B, Ds = start.shape
    Bg, Dg = goal.shape
    Bc, C, H, W = environment.shape
    assert B == Bg == Bc

    out_dtype = start.dtype
    # Metadata-only reshape (contiguous NCHW -> (B, C*H*W)); no HBM traffic.
    De = C * H * W
    env_flat = environment.reshape(B, De)
    Dout = De + Ds + Dg

    itemsize = jnp.dtype(out_dtype).itemsize
    row_bytes = (Ds * start.dtype.itemsize
                 + Dg * goal.dtype.itemsize
                 + De * environment.dtype.itemsize
                 + Dout * itemsize)

    if batch_tile is None:
        TB = _pick_batch_tile(B, row_bytes)
    else:
        TB = batch_tile
        assert TB == B or TB % 8 == 0, "batch_tile must be B or a multiple of 8"

    grid = (pl.cdiv(B, TB),)

    bytes_accessed = (start.size * start.dtype.itemsize
                      + goal.size * goal.dtype.itemsize
                      + env_flat.size * environment.dtype.itemsize
                      + B * Dout * itemsize)

    out = pl.pallas_call(
        _context_concat_kernel,
        out_shape=jax.ShapeDtypeStruct((B, Dout), out_dtype),
        grid_spec=pl.GridSpec(
            grid=grid,
            in_specs=[
                pl.BlockSpec((TB, Ds), lambda b: (b, 0)),
                pl.BlockSpec((TB, Dg), lambda b: (b, 0)),
                pl.BlockSpec((TB, De), lambda b: (b, 0)),
            ],
            out_specs=pl.BlockSpec((TB, Dout), lambda b: (b, 0)),
        ),
        compiler_params=pltpu.CompilerParams(
            dimension_semantics=("parallel",),
        ),
        cost_estimate=pl.CostEstimate(
            flops=0, transcendentals=0, bytes_accessed=int(bytes_accessed)),
    )(start, goal, env_flat)
    return out


def _reference(start, goal, environment):
    B = start.shape[0]
    env_flat = environment.reshape(B, -1).astype(start.dtype)
    return jnp.concatenate([env_flat, start, goal], axis=-1)


if __name__ == "__main__":
    key = jax.random.PRNGKey(0)
    k_start, k_goal, k_env, k2s, k2g, k2e = jax.random.split(key, 6)

    # Small shapes consistent with the module interface.
    B, Dstate = 2, 4          # small batch, 4-D start/goal states
    C, Hs, Ws = 1, 16, 16     # single-channel 16x16 environment (NCHW)

    start = jax.random.normal(k_start, (B, Dstate), dtype=jnp.float32)
    goal = jax.random.normal(k_goal, (B, Dstate), dtype=jnp.float32)
    environment = jax.random.normal(k_env, (B, C, Hs, Ws), dtype=jnp.float32)

    context = jax.block_until_ready(
        base_context_net_forward(start, goal, environment))
    ref = _reference(start, goal, environment)
    assert context.shape == (B, C * Hs * Ws + Dstate + Dstate)
    assert jnp.allclose(context, ref), "Pallas context mismatch vs reference"

    # Second check: exercise the batch-tiled (grid > 1, pipelined) path.
    B2 = 16
    start2 = jax.random.normal(k2s, (B2, Dstate), dtype=jnp.float32)
    goal2 = jax.random.normal(k2g, (B2, Dstate), dtype=jnp.float32)
    env2 = jax.random.normal(k2e, (B2, C, Hs, Ws), dtype=jnp.float32)
    context2 = jax.block_until_ready(
        base_context_net_forward(start2, goal2, env2, batch_tile=8))
    assert jnp.allclose(context2, _reference(start2, goal2, env2)), \
        "Pallas tiled context mismatch vs reference"

    print("KERNEL_OK")
</pallas_src>

<mosaic_0001>
module attributes {stable_mosaic.version = 11 : i64} {
  func.func @_context_concat_kernel(%arg0: i32, %arg1: memref<2x4xf32, #tpu.memory_space<vmem>>, %arg2: memref<2x4xf32, #tpu.memory_space<vmem>>, %arg3: memref<2x256xf32, #tpu.memory_space<vmem>>, %arg4: memref<2x264xf32, #tpu.memory_space<vmem>>) attributes {dimension_semantics = [#tpu.dimension_semantics<parallel>], iteration_bounds = array<i64: 1>, scalar_prefetch = 0 : i64, scratch_operands = 0 : i64, tpu.core_type = #tpu.core_type<tc>, window_params = [{transform_indices = @transform_0, window_bounds = array<i64: 2, 4>}, {transform_indices = @transform_1, window_bounds = array<i64: 2, 4>}, {transform_indices = @transform_2, window_bounds = array<i64: 2, 256>}, {transform_indices = @transform_3, window_bounds = array<i64: 2, 264>}]} {
    %c0 = arith.constant 0 : index
    %c0_0 = arith.constant 0 : index
    %0 = vector.load %arg3[%c0, %c0_0] : memref<2x256xf32, #tpu.memory_space<vmem>>, vector<2x256xf32>
    %c0_1 = arith.constant 0 : index
    %c0_2 = arith.constant 0 : index
    %1 = vector.load %arg4[%c0_1, %c0_2] : memref<2x264xf32, #tpu.memory_space<vmem>>, vector<2x256xf32>
    tpu.vector_store %arg4[%c0_1, %c0_2], %0 {strides = array<i32>} : memref<2x264xf32, #tpu.memory_space<vmem>>, vector<2x256xf32>,
    %c0_3 = arith.constant 0 : index
    %c0_4 = arith.constant 0 : index
    %2 = vector.load %arg1[%c0_3, %c0_4] : memref<2x4xf32, #tpu.memory_space<vmem>>, vector<2x4xf32>
    %c0_5 = arith.constant 0 : index
    %c256 = arith.constant 256 : index
    %3 = vector.load %arg4[%c0_5, %c256] : memref<2x264xf32, #tpu.memory_space<vmem>>, vector<2x4xf32>
    tpu.vector_store %arg4[%c0_5, %c256], %2 {strides = array<i32>} : memref<2x264xf32, #tpu.memory_space<vmem>>, vector<2x4xf32>,
    %c0_6 = arith.constant 0 : index
    %c0_7 = arith.constant 0 : index
    %4 = vector.load %arg2[%c0_6, %c0_7] : memref<2x4xf32, #tpu.memory_space<vmem>>, vector<2x4xf32>
    %c0_8 = arith.constant 0 : index
    %c260 = arith.constant 260 : index
    %5 = vector.load %arg4[%c0_8, %c260] : memref<2x264xf32, #tpu.memory_space<vmem>>, vector<2x4xf32>
    tpu.vector_store %arg4[%c0_8, %c260], %4 {strides = array<i32>} : memref<2x264xf32, #tpu.memory_space<vmem>>, vector<2x4xf32>,
    return
  }
  func.func @transform_0(%arg0: i32) -> (i32, i32) {
    %c0_i32 = arith.constant 0 : i32
    %c0_i32_0 = arith.constant 0 : i32
    return %arg0, %c0_i32 : i32, i32
  }
  func.func @transform_1(%arg0: i32) -> (i32, i32) {
    %c0_i32 = arith.constant 0 : i32
    %c0_i32_0 = arith.constant 0 : i32
    return %arg0, %c0_i32 : i32, i32
  }
  func.func @transform_2(%arg0: i32) -> (i32, i32) {
    %c0_i32 = arith.constant 0 : i32
    %c0_i32_0 = arith.constant 0 : i32
    return %arg0, %c0_i32 : i32, i32
  }
  func.func @transform_3(%arg0: i32) -> (i32, i32) {
    %c0_i32 = arith.constant 0 : i32
    %c0_i32_0 = arith.constant 0 : i32
    return %arg0, %c0_i32 : i32, i32
  }
}

</mosaic_0001>

<llo_original>
// kernel: tpu_custom_call.1
$region0: #{tpu_custom_call.1}
  #allocation0 [shape = 'u32[]', space=smem, size = 0x4, offset = 0x4, fixed_abs, tag = 'smem constant byte address 0x4 - core index']
  #allocation1 [shape = 'u32[72,128]{1,0:T(1,128)}', space=vmem, size = 0x9000, scoped, tag = 'internal scratch']
  %s0 = inlined_call_operand.hbm [shape: f32[2,4], index: 0, kind: input, shape index: {}]
  %s1 = inlined_call_operand.hbm [shape: f32[2,4], index: 1, kind: input, shape index: {}]
  %s2 = inlined_call_operand.hbm [shape: f32[2,256], index: 2, kind: input, shape index: {}]
  %s3 = inlined_call_operand.hbm [shape: f32[2,264], index: 3, kind: output, shape index: {}]
  %s4 = sld [smem:[#allocation0]]
  $region34: #{tpu_custom_call.1} parent=0
    _
  %s6 = ssub.s32 1, %s4
  %s7 = scalar_select 0, %s6, %s4
  $region1: #{tpu_custom_call.1} parent=0
    #allocation2 [shape = 'u8[1024]{0}', space=vmem, size = 0x400, scoped, tag = 'input window, operand 0, single buffered']
    #allocation3 [shape = 's32[1]{0}', space=sflag, size = 0x4, scoped, tag = 'scoped memory for tpu_custom_call.1']
    #allocation4 [shape = 's32[1]{0}', space=sflag, size = 0x4, scoped, tag = 'scoped memory for tpu_custom_call.1']
    #allocation5 [shape = 'u8[1024]{0}', space=vmem, size = 0x400, scoped, tag = 'input window, operand 1, single buffered']
    #allocation6 [shape = 's32[1]{0}', space=sflag, size = 0x4, scoped, tag = 'scoped memory for tpu_custom_call.1']
    #allocation7 [shape = 'u8[2048]{0}', space=vmem, size = 0x800, scoped, tag = 'input window, operand 2, single buffered']
    #allocation8 [shape = 'u8[3072]{0}', space=vmem, size = 0xc00, scoped, tag = 'output window, operand 0, single buffered']
    %8 = vsyncpa [#allocation3], 0
    %9 = vsyncpa [#allocation6], 0
    %10 = vsyncpa [#allocation4], 0
    // Predicated region
    $region2: #{tpu_custom_call.1} parent=1 // pred_check
      _
    $region3: #{tpu_custom_call.1} parent=1 // pred_check_branch
      %12 = sbr.rel (0) target = $region5
    $region4: #{tpu_custom_call.1} parent=1 // pred_region
      %14 = vsyncadd [#allocation3], 0
      %s16 = sshll.u32 %s0, 4
      %s17 = int_to_ptr.hbm [resolvable:$true] %s16
      %s18 = sshll.u32 [#allocation2], 4
      %s19 = int_to_ptr.vmem [resolvable:$true] %s18
      %21 = dma.hbm_to_vmem [thread:$0]  %s17, 32, %s19, [#allocation3]
    $region5: #{tpu_custom_call.1} parent=1 // pred_fallthru
      _
    // Predicated region
    $region6: #{tpu_custom_call.1} parent=1 // pred_check
      _
    $region7: #{tpu_custom_call.1} parent=1 // pred_check_branch
      %23 = sbr.rel (0) target = $region9
    $region8: #{tpu_custom_call.1} parent=1 // pred_region
      %25 = vsyncadd [#allocation6], 0
      %s27 = sshll.u32 %s1, 4
      %s28 = int_to_ptr.hbm [resolvable:$true] %s27
      %s29 = sshll.u32 [#allocation5], 4
      %s30 = int_to_ptr.vmem [resolvable:$true] %s29
      %32 = dma.hbm_to_vmem [thread:$0]  %s28, 32, %s30, [#allocation6]
    $region9: #{tpu_custom_call.1} parent=1 // pred_fallthru
      _
    // Predicated region
    $region10: #{tpu_custom_call.1} parent=1 // pred_check
      _
    $region11: #{tpu_custom_call.1} parent=1 // pred_check_branch
      %34 = sbr.rel (0) target = $region13
    $region12: #{tpu_custom_call.1} parent=1 // pred_region
      %36 = vsyncadd [#allocation6], 0
      %s38 = sshll.u32 %s2, 4
      %s39 = int_to_ptr.hbm [resolvable:$true] %s38
      %s40 = sshll.u32 [#allocation7], 4
      %s41 = int_to_ptr.vmem [resolvable:$true] %s40
      %43 = dma.hbm_to_vmem [thread:$0]  %s39, 64, %s41, [#allocation6]
    $region13: #{tpu_custom_call.1} parent=1 // pred_fallthru
      _
    // Predicated region
    $region14: #{tpu_custom_call.1} parent=1 // pred_check
      _
    $region15: #{tpu_custom_call.1} parent=1 // pred_check_branch
      %45 = sbr.rel (0) target = $region17
    $region16: #{tpu_custom_call.1} parent=1 // pred_region
      %47 = dma.done [#allocation3], 32
    $region17: #{tpu_custom_call.1} parent=1 // pred_fallthru
      _
    // Predicated region
    $region18: #{tpu_custom_call.1} parent=1 // pred_check
      _
    $region19: #{tpu_custom_call.1} parent=1 // pred_check_branch
      %49 = sbr.rel (0) target = $region21
    $region20: #{tpu_custom_call.1} parent=1 // pred_region
      %51 = dma.done [#allocation6], 32
    $region21: #{tpu_custom_call.1} parent=1 // pred_fallthru
      _
    // Predicated region
    $region22: #{tpu_custom_call.1} parent=1 // pred_check
      _
    $region23: #{tpu_custom_call.1} parent=1 // pred_check_branch
      %53 = sbr.rel (0) target = $region25
    $region24: #{tpu_custom_call.1} parent=1 // pred_region
      %55 = dma.done [#allocation6], 64
    $region25: #{tpu_custom_call.1} parent=1 // pred_fallthru
      _
    %v56 = vld [vmem:[#allocation7] sm:$0xf]
    %57 = vst [vmem:[#allocation8] sm:$0xf] %v56
    %v58 = vld [vmem:[#allocation2] sm:$0x3]
    %vm59 = vcmask 25600
    %60 = vst.msk [vmem:[#allocation8 + $0x4] sm:$0x3] %vm59, %v58
    %v61 = vld [vmem:[#allocation5] sm:$0x3]
    %63 = vrot.lane.b32.xlu0 %v61, 4
    %v64 = vpop.permute.xlu0 %63
    %vm66 = vcmask 58400
    %67 = vst.msk [vmem:[#allocation8 + $0x4] sm:$0x3] %vm66, %v64
    // Predicated region
    $region26: #{tpu_custom_call.1} parent=1 // pred_check
      _
    $region27: #{tpu_custom_call.1} parent=1 // pred_check_branch
      %69 = sbr.rel (0) target = $region29
    $region28: #{tpu_custom_call.1} parent=1 // pred_region
      %71 = vsyncadd [#allocation4], 0
      %s73 = sshll.u32 [#allocation8], 4
      %s74 = int_to_ptr.vmem [resolvable:$true] %s73
      %s75 = sshll.u32 %s3, 4
      %s76 = int_to_ptr.hbm [resolvable:$true] %s75
      %78 = dma.vmem_to_hbm [thread:$0]  %s74, 96, %s76, [#allocation4]
    $region29: #{tpu_custom_call.1} parent=1 // pred_fallthru
      _
    // Predicated region
    $region30: #{tpu_custom_call.1} parent=1 // pred_check
      _
    $region31: #{tpu_custom_call.1} parent=1 // pred_check_branch
      %80 = sbr.rel (0) target = $region33
    $region32: #{tpu_custom_call.1} parent=1 // pred_region
      %82 = dma.done [#allocation4], 96
    $region33: #{tpu_custom_call.1} parent=1 // pred_fallthru
      _
    %83 = vsyncpa [#allocation3], 1
    %84 = vsyncpa [#allocation6], 1
    %85 = vsyncpa [#allocation4], 1

</llo_original>
